<compile_context>
chip_gen: v5e
topology: v5e:2x2
jax: 0.10.0
libtpu: 0.0.40
codegen_flags: <defaults>
</compile_context>

<pallas_src>
import functools

import jax
import jax.numpy as jnp
from jax.experimental import pallas as pl
from jax.experimental.pallas import tpu as pltpu


def _ae_forward_kernel(x_ref,
                       we1_ref, be1_ref,
                       wc_ref, bc_ref,
                       wd2_ref, bd2_ref,
                       recon_ref, z_ref, *, l_pad):
    """Autoencoder forward for one batch tile: 3 MXU matmuls + f32 epilogue."""
    x = x_ref[...]                                                        # (TB, D) bf16

    # --- encoder layer 1 ---
    h1 = jnp.dot(x, we1_ref[...], preferred_element_type=jnp.float32)    # (TB, H)
    h1 = jnp.maximum(h1 + be1_ref[...], 0.0)
    h1b = h1.astype(jnp.bfloat16)

    # --- latent head + decoder layer 1, fused into one N = l_pad + H matmul ---
    hc = jnp.dot(h1b, wc_ref[...], preferred_element_type=jnp.float32)   # (TB, l_pad+H)
    hc = hc + bc_ref[...]
    z_ref[...] = hc[:, :l_pad].astype(z_ref.dtype)                       # lane-dense store
    h2 = jnp.maximum(hc[:, l_pad:], 0.0)                                 # (TB, H)

    # --- decoder layer 2 + sigmoid (exp + approx reciprocal -> EUP slot) ---
    y = jnp.dot(h2.astype(jnp.bfloat16), wd2_ref[...],
                preferred_element_type=jnp.float32) + bd2_ref[...]       # (TB, D)
    recon_ref[...] = pl.reciprocal(1.0 + jnp.exp(-y),
                                   approx=True).astype(recon_ref.dtype)


def init_params(key, d_in, d_hidden, d_latent, dtype=jnp.float32):
    """Deterministic (PRNGKey-seeded) parameter init, PyTorch Linear-style scale."""
    ks = jax.random.split(key, 8)

    def lin(kw, kb, fan_in, fan_out):
        bound = 1.0 / jnp.sqrt(fan_in)
        w = jax.random.uniform(kw, (fan_in, fan_out), dtype, -bound, bound)
        b = jax.random.uniform(kb, (1, fan_out), dtype, -bound, bound)
        return w, b

    we1, be1 = lin(ks[0], ks[1], d_in, d_hidden)
    we2, be2 = lin(ks[2], ks[3], d_hidden, d_latent)
    wd1, bd1 = lin(ks[4], ks[5], d_latent, d_hidden)
    wd2, bd2 = lin(ks[6], ks[7], d_hidden, d_in)
    return dict(we1=we1, be1=be1, we2=we2, be2=be2,
                wd1=wd1, bd1=bd1, wd2=wd2, bd2=bd2)


def _choose_tile_b(batch, tile_b):
    """Pick a batch tile that divides B when possible and exposes >=2 grid steps."""
    tb = min(tile_b, batch)
    if batch % tb:
        for c in range(tb, 7, -1):                    # largest multiple-of-8 divisor
            if batch % c == 0 and c % 8 == 0:
                return c
        return tb                                     # fall back to masked tail writeback
    if batch // tb < 2 and batch >= 16 and (batch // 2) % 8 == 0:
        tb = batch // 2                               # give v7x's 2nd TensorCore work
    return tb


def autoencoder_forward(x_nchw, params, *, tile_b=512, out_dtype=jnp.bfloat16):
    """Forward pass. x_nchw: (B, C, H, W). Returns (recon_nchw, z)."""
    B, C, Hi, Wi = x_nchw.shape
    D = C * Hi * Wi
    # Mem-bound kernel: ship the input as bf16 (halves input DMA + x double-buffer).
    x_flat = x_nchw.reshape(B, D).astype(jnp.bfloat16)

    we1, be1 = params["we1"], params["be1"]
    we2, be2 = params["we2"], params["be2"]
    wd1, bd1 = params["wd1"], params["bd1"]
    wd2, bd2 = params["wd2"], params["bd2"]

    Hh = we1.shape[1]
    L = we2.shape[1]
    L_pad = max(128, pl.cdiv(L, 128) * 128)

    # Algebraic fusion (valid: no nonlinearity on the latent in this module):
    #   z @ wd1 + bd1 == h1 @ (we2 @ wd1) + (be2 @ wd1 + bd1)
    w_fused = we2 @ wd1                                               # (H, H)  f32
    b_fused = be2 @ wd1 + bd1                                         # (1, H)  f32

    # Lane-dense latent head padded to 128 lanes, concatenated with the fused
    # decoder-1 weight -> one (H, L_pad+H) = 256-wide contraction (fills v6e/v7x MXU).
    we2p = jnp.pad(we2, ((0, 0), (0, L_pad - L)))
    be2p = jnp.pad(be2, ((0, 0), (0, L_pad - L)))
    wc = jnp.concatenate([we2p, w_fused], axis=1).astype(jnp.bfloat16)  # (H, L_pad+H)
    bc = jnp.concatenate([be2p, b_fused], axis=1).astype(jnp.float32)   # (1, L_pad+H)

    we1b = we1.astype(jnp.bfloat16)
    wd2b = wd2.astype(jnp.bfloat16)
    be1f = be1.astype(jnp.float32)
    bd2f = bd2.astype(jnp.float32)

    tb = _choose_tile_b(B, tile_b)
    n_tiles = pl.cdiv(B, tb)

    def const(shape):
        return pl.BlockSpec(shape, lambda i: (0,) * len(shape))

    # VMEM budget: 2x double-buffer on everything (default pipelining) + margin.
    out_bytes = jnp.dtype(out_dtype).itemsize
    weight_bytes = 2 * (we1b.size + wc.size + wd2b.size)              # bf16
    bias_bytes = 4 * (be1f.size + bc.size + bd2f.size)                # f32
    act_bytes = tb * (2 * D + out_bytes * (D + L_pad))                # per buffer set
    vmem_needed = 2 * (weight_bytes + bias_bytes + act_bytes) + (8 << 20)
    try:
        vmem_cap = pltpu.get_tpu_info().vmem_capacity_bytes
    except Exception:
        vmem_cap = 64 << 20                                           # v7x per-core floor
    vmem_limit = int(min(max(vmem_needed, 32 << 20), int(0.75 * vmem_cap)))

    cost = pl.CostEstimate(
        flops=2 * B * Hh * (D + (L_pad + Hh) + D),
        transcendentals=B * D,                                        # exp in sigmoid
        bytes_accessed=int(2 * B * D + out_bytes * B * (D + L_pad)
                           + weight_bytes + bias_bytes))

    kernel = functools.partial(_ae_forward_kernel, l_pad=L_pad)

    recon_flat, z_pad = pl.pallas_call(
        kernel,
        out_shape=(
            jax.ShapeDtypeStruct((B, D), out_dtype),
            jax.ShapeDtypeStruct((B, L_pad), out_dtype),
        ),
        grid=(n_tiles,),
        in_specs=[
            pl.BlockSpec((tb, D), lambda i: (i, 0)),                  # x batch tile
            const((D, Hh)), const((1, Hh)),                           # we1 / be1
            const((Hh, L_pad + Hh)), const((1, L_pad + Hh)),          # [we2p | we2@wd1]
            const((Hh, D)), const((1, D)),                            # wd2 / bd2
        ],
        out_specs=(
            pl.BlockSpec((tb, D), lambda i: (i, 0)),
            pl.BlockSpec((tb, L_pad), lambda i: (i, 0)),
        ),
        compiler_params=pltpu.CompilerParams(
            dimension_semantics=("parallel",),
            vmem_limit_bytes=vmem_limit),
        cost_estimate=cost,
    )(x_flat, we1b, be1f, wc, bc, wd2b, bd2f)

    return recon_flat.reshape(B, C, Hi, Wi), z_pad[:, :L]


def _reference_forward(x_nchw, params):
    """Pure-JAX f32 reference for a sanity check."""
    B = x_nchw.shape[0]
    x = x_nchw.reshape(B, -1)
    h1 = jnp.maximum(x @ params["we1"] + params["be1"], 0.0)
    z = h1 @ params["we2"] + params["be2"]
    h2 = jnp.maximum(z @ params["wd1"] + params["bd1"], 0.0)
    y = jax.nn.sigmoid(h2 @ params["wd2"] + params["bd2"])
    return y.reshape(x_nchw.shape), z


if __name__ == "__main__":
    key = jax.random.PRNGKey(0)
    k_x, k_p = jax.random.split(key)

    # input_shape = (C, H, W) = (4, 16, 16), flatten=True -> D = 1024
    B, C, H, W = 2, 4, 16, 16
    D = C * H * W
    HIDDEN, LATENT = 128, 32

    x = jax.random.uniform(k_x, (B, C, H, W), jnp.float32)
    params = init_params(k_p, D, HIDDEN, LATENT)

    recon, z = autoencoder_forward(x, params)
    recon = jax.block_until_ready(recon)
    z = jax.block_until_ready(z)

    recon_ref, z_ref = _reference_forward(x, params)
    assert recon.shape == (B, C, H, W) and z.shape == (B, LATENT)

    # bf16 input/operands/outputs (f32 accumulate) vs. pure-f32 reference -> loose tol.
    r32 = recon.astype(jnp.float32)
    z32 = z.astype(jnp.float32)
    assert jnp.allclose(r32, recon_ref, atol=3e-2, rtol=3e-2), \
        float(jnp.max(jnp.abs(r32 - recon_ref)))
    assert jnp.allclose(z32, z_ref, atol=3e-2, rtol=3e-2), \
        float(jnp.max(jnp.abs(z32 - z_ref)))

    print("KERNEL_OK")
</pallas_src>

<mosaic_0001>
module attributes {stable_mosaic.version = 11 : i64} {
  func.func @_ae_forward_kernel(%arg0: i32, %arg1: memref<2x1024xbf16, #tpu.memory_space<vmem>>, %arg2: memref<1024x128xbf16, #tpu.memory_space<vmem>>, %arg3: memref<1x128xf32, #tpu.memory_space<vmem>>, %arg4: memref<128x256xbf16, #tpu.memory_space<vmem>>, %arg5: memref<1x256xf32, #tpu.memory_space<vmem>>, %arg6: memref<128x1024xbf16, #tpu.memory_space<vmem>>, %arg7: memref<1x1024xf32, #tpu.memory_space<vmem>>, %arg8: memref<2x1024xbf16, #tpu.memory_space<vmem>>, %arg9: memref<2x128xbf16, #tpu.memory_space<vmem>>) attributes {dimension_semantics = [#tpu.dimension_semantics<parallel>], iteration_bounds = array<i64: 1>, scalar_prefetch = 0 : i64, scratch_operands = 0 : i64, tpu.core_type = #tpu.core_type<tc>, window_params = [{transform_indices = @transform_0, window_bounds = array<i64: 2, 1024>}, {pipeline_mode = #tpu.pipeline_mode<synchronous>, transform_indices = @transform_1, window_bounds = array<i64: 1024, 128>}, {pipeline_mode = #tpu.pipeline_mode<synchronous>, transform_indices = @transform_2, window_bounds = array<i64: 1, 128>}, {pipeline_mode = #tpu.pipeline_mode<synchronous>, transform_indices = @transform_3, window_bounds = array<i64: 128, 256>}, {pipeline_mode = #tpu.pipeline_mode<synchronous>, transform_indices = @transform_4, window_bounds = array<i64: 1, 256>}, {pipeline_mode = #tpu.pipeline_mode<synchronous>, transform_indices = @transform_5, window_bounds = array<i64: 128, 1024>}, {pipeline_mode = #tpu.pipeline_mode<synchronous>, transform_indices = @transform_6, window_bounds = array<i64: 1, 1024>}, {transform_indices = @transform_7, window_bounds = array<i64: 2, 1024>}, {transform_indices = @transform_8, window_bounds = array<i64: 2, 128>}]} {
    %c0 = arith.constant 0 : index
    %c0_0 = arith.constant 0 : index
    %0 = vector.load %arg1[%c0, %c0_0] : memref<2x1024xbf16, #tpu.memory_space<vmem>>, vector<2x1024xbf16>
    %c0_1 = arith.constant 0 : index
    %c0_2 = arith.constant 0 : index
    %1 = vector.load %arg2[%c0_1, %c0_2] : memref<1024x128xbf16, #tpu.memory_space<vmem>>, vector<1024x128xbf16>
    %cst = arith.constant dense<0.000000e+00> : vector<2x128xf32>
    %2 = tpu.matmul %0, %1, %cst {dimension_numbers = #tpu.dot_dimension_numbers<[1], [0], [0], [1], [0, 0, 1, 1], [], []>} : vector<2x1024xbf16>, vector<1024x128xbf16>, vector<2x128xf32> -> vector<2x128xf32>
    %c0_3 = arith.constant 0 : index
    %c0_4 = arith.constant 0 : index
    %3 = vector.load %arg3[%c0_3, %c0_4] : memref<1x128xf32, #tpu.memory_space<vmem>>, vector<1x128xf32>
    %4 = vector.broadcast %3 : vector<1x128xf32> to vector<2x128xf32>
    %5 = arith.addf %2, %4 : vector<2x128xf32>
    %cst_5 = arith.constant 0.000000e+00 : f32
    %6 = vector.broadcast %cst_5 : f32 to vector<2x128xf32>
    %7 = arith.maximumf %5, %6 : vector<2x128xf32>
    %8 = arith.truncf %7 : vector<2x128xf32> to vector<2x128xbf16>
    %c0_6 = arith.constant 0 : index
    %c0_7 = arith.constant 0 : index
    %9 = vector.load %arg4[%c0_6, %c0_7] : memref<128x256xbf16, #tpu.memory_space<vmem>>, vector<128x256xbf16>
    %cst_8 = arith.constant dense<0.000000e+00> : vector<2x256xf32>
    %10 = tpu.matmul %8, %9, %cst_8 {dimension_numbers = #tpu.dot_dimension_numbers<[1], [0], [0], [1], [0, 0, 1, 1], [], []>} : vector<2x128xbf16>, vector<128x256xbf16>, vector<2x256xf32> -> vector<2x256xf32>
    %c0_9 = arith.constant 0 : index
    %c0_10 = arith.constant 0 : index
    %11 = vector.load %arg5[%c0_9, %c0_10] : memref<1x256xf32, #tpu.memory_space<vmem>>, vector<1x256xf32>
    %12 = vector.broadcast %11 : vector<1x256xf32> to vector<2x256xf32>
    %13 = arith.addf %10, %12 : vector<2x256xf32>
    %14 = vector.extract_strided_slice %13 {offsets = [0, 0], sizes = [2, 128], strides = [1, 1]} : vector<2x256xf32> to vector<2x128xf32>
    %15 = arith.truncf %14 : vector<2x128xf32> to vector<2x128xbf16>
    %c0_11 = arith.constant 0 : index
    %c0_12 = arith.constant 0 : index
    %16 = vector.load %arg9[%c0_11, %c0_12] : memref<2x128xbf16, #tpu.memory_space<vmem>>, vector<2x128xbf16>
    tpu.vector_store %arg9[%c0_11, %c0_12], %15 {strides = array<i32>} : memref<2x128xbf16, #tpu.memory_space<vmem>>, vector<2x128xbf16>,
    %17 = vector.extract_strided_slice %13 {offsets = [0, 128], sizes = [2, 128], strides = [1, 1]} : vector<2x256xf32> to vector<2x128xf32>
    %cst_13 = arith.constant 0.000000e+00 : f32
    %18 = vector.broadcast %cst_13 : f32 to vector<2x128xf32>
    %19 = arith.maximumf %17, %18 : vector<2x128xf32>
    %20 = arith.truncf %19 : vector<2x128xf32> to vector<2x128xbf16>
    %c0_14 = arith.constant 0 : index
    %c0_15 = arith.constant 0 : index
    %21 = vector.load %arg6[%c0_14, %c0_15] : memref<128x1024xbf16, #tpu.memory_space<vmem>>, vector<128x1024xbf16>
    %cst_16 = arith.constant dense<0.000000e+00> : vector<2x1024xf32>
    %22 = tpu.matmul %20, %21, %cst_16 {dimension_numbers = #tpu.dot_dimension_numbers<[1], [0], [0], [1], [0, 0, 1, 1], [], []>} : vector<2x128xbf16>, vector<128x1024xbf16>, vector<2x1024xf32> -> vector<2x1024xf32>
    %c0_17 = arith.constant 0 : index
    %c0_18 = arith.constant 0 : index
    %23 = vector.load %arg7[%c0_17, %c0_18] : memref<1x1024xf32, #tpu.memory_space<vmem>>, vector<1x1024xf32>
    %24 = vector.broadcast %23 : vector<1x1024xf32> to vector<2x1024xf32>
    %25 = arith.addf %22, %24 : vector<2x1024xf32>
    %cst_19 = arith.constant 0.000000e+00 : f32
    %26 = vector.broadcast %cst_19 : f32 to vector<2x1024xf32>
    %27 = arith.subf %26, %25 : vector<2x1024xf32>
    %28 = math.exp %27 : vector<2x1024xf32>
    %cst_20 = arith.constant 1.000000e+00 : f32
    %29 = vector.broadcast %cst_20 : f32 to vector<2x1024xf32>
    %30 = arith.addf %29, %28 : vector<2x1024xf32>
    %31 = tpu.reciprocal %30 {approx = true} : vector<2x1024xf32> -> vector<2x1024xf32>
    %32 = arith.truncf %31 : vector<2x1024xf32> to vector<2x1024xbf16>
    %c0_21 = arith.constant 0 : index
    %c0_22 = arith.constant 0 : index
    %33 = vector.load %arg8[%c0_21, %c0_22] : memref<2x1024xbf16, #tpu.memory_space<vmem>>, vector<2x1024xbf16>
    tpu.vector_store %arg8[%c0_21, %c0_22], %32 {strides = array<i32>} : memref<2x1024xbf16, #tpu.memory_space<vmem>>, vector<2x1024xbf16>,
    return
  }
  func.func @transform_0(%arg0: i32) -> (i32, i32) {
    %c0_i32 = arith.constant 0 : i32
    %c0_i32_0 = arith.constant 0 : i32
    return %arg0, %c0_i32 : i32, i32
  }
  func.func @transform_1(%arg0: i32) -> (i32, i32) {
    %c0_i32 = arith.constant 0 : i32
    %c0_i32_0 = arith.constant 0 : i32
    %c0_i32_1 = arith.constant 0 : i32
    return %c0_i32, %c0_i32_0 : i32, i32
  }
  func.func @transform_2(%arg0: i32) -> (i32, i32) {
    %c0_i32 = arith.constant 0 : i32
    %c0_i32_0 = arith.constant 0 : i32
    %c0_i32_1 = arith.constant 0 : i32
    return %c0_i32, %c0_i32_0 : i32, i32
  }
  func.func @transform_3(%arg0: i32) -> (i32, i32) {
    %c0_i32 = arith.constant 0 : i32
    %c0_i32_0 = arith.constant 0 : i32
    %c0_i32_1 = arith.constant 0 : i32
    return %c0_i32, %c0_i32_0 : i32, i32
  }
  func.func @transform_4(%arg0: i32) -> (i32, i32) {
    %c0_i32 = arith.constant 0 : i32
    %c0_i32_0 = arith.constant 0 : i32
    %c0_i32_1 = arith.constant 0 : i32
    return %c0_i32, %c0_i32_0 : i32, i32
  }
  func.func @transform_5(%arg0: i32) -> (i32, i32) {
    %c0_i32 = arith.constant 0 : i32
    %c0_i32_0 = arith.constant 0 : i32
    %c0_i32_1 = arith.constant 0 : i32
    return %c0_i32, %c0_i32_0 : i32, i32
  }
  func.func @transform_6(%arg0: i32) -> (i32, i32) {
    %c0_i32 = arith.constant 0 : i32
    %c0_i32_0 = arith.constant 0 : i32
    %c0_i32_1 = arith.constant 0 : i32
    return %c0_i32, %c0_i32_0 : i32, i32
  }
  func.func @transform_7(%arg0: i32) -> (i32, i32) {
    %c0_i32 = arith.constant 0 : i32
    %c0_i32_0 = arith.constant 0 : i32
    return %arg0, %c0_i32 : i32, i32
  }
  func.func @transform_8(%arg0: i32) -> (i32, i32) {
    %c0_i32 = arith.constant 0 : i32
    %c0_i32_0 = arith.constant 0 : i32
    return %arg0, %c0_i32 : i32, i32
  }
}

</mosaic_0001>

<llo_original>
// kernel: tpu_custom_call.1
$region0: #{tpu_custom_call.1}
  #allocation0 [shape = 'u32[]', space=smem, size = 0x4, offset = 0x4, fixed_abs, tag = 'smem constant byte address 0x4 - core index']
  #allocation1 [shape = 'u32[72,128]{1,0:T(1,128)}', space=vmem, size = 0x9000, scoped, tag = 'internal scratch']
  %s0 = inlined_call_operand.hbm [shape: bf16[2,1024], index: 0, kind: input, shape index: {}]
  %s1 = inlined_call_operand.hbm [shape: bf16[1024,128], index: 1, kind: input, shape index: {}]
  %s2 = inlined_call_operand.vmem [shape: f32[1,128], index: 2, kind: input, shape index: {}]
  %s3 = inlined_call_operand.hbm [shape: bf16[128,256], index: 3, kind: input, shape index: {}]
  %s4 = inlined_call_operand.vmem [shape: f32[1,256], index: 4, kind: input, shape index: {}]
  %s5 = inlined_call_operand.hbm [shape: bf16[128,1024], index: 5, kind: input, shape index: {}]
  %s6 = inlined_call_operand.hbm [shape: f32[1,1024], index: 6, kind: input, shape index: {}]
  %s7 = inlined_call_operand.hbm [shape: bf16[2,1024], index: 7, kind: output, shape index: {0}]
  %s8 = inlined_call_operand.hbm [shape: bf16[2,128], index: 8, kind: output, shape index: {1}]
  %9 = xla_tuple %s7, %s8
  %s10 = sld [smem:[#allocation0]]
  $region66: #{tpu_custom_call.1} parent=0
    _
  %s12 = ssub.s32 1, %s10
  %s13 = scalar_select 0, %s12, %s10
  $region1: #{tpu_custom_call.1} parent=0
    #allocation2 [shape = 'u8[4096]{0}', space=vmem, size = 0x1000, scoped, tag = 'input window, operand 0, single buffered']
    #allocation3 [shape = 's32[1]{0}', space=sflag, size = 0x4, scoped, tag = 'scoped memory for tpu_custom_call.1']
    #allocation4 [shape = 's32[1]{0}', space=sflag, size = 0x4, scoped, tag = 'scoped memory for tpu_custom_call.1']
    #allocation5 [shape = 'u8[262144]{0}', space=vmem, size = 0x40000, scoped, tag = 'input window, operand 1, single buffered']
    #allocation6 [shape = 's32[1]{0}', space=sflag, size = 0x4, scoped, tag = 'scoped memory for tpu_custom_call.1']
    #allocation7 [shape = 'u8[65536]{0}', space=vmem, size = 0x10000, scoped, tag = 'input window, operand 3, single buffered']
    #allocation8 [shape = 'u8[262144]{0}', space=vmem, size = 0x40000, scoped, tag = 'input window, operand 5, single buffered']
    #allocation9 [shape = 's32[1]{0}', space=sflag, size = 0x4, scoped, tag = 'scoped memory for tpu_custom_call.1']
    #allocation10 [shape = 'u8[4096]{0}', space=vmem, size = 0x1000, scoped, tag = 'input window, operand 6, single buffered']
    #allocation11 [shape = 'u8[4096]{0}', space=vmem, size = 0x1000, scoped, tag = 'output window, operand 0, single buffered']
    #allocation12 [shape = 'u8[512]{0}', space=vmem, size = 0x400, scoped, tag = 'output window, operand 1, single buffered']
    #allocation13 [shape = 's32[1]{0}', space=sflag, size = 0x4, scoped, tag = 'scoped memory for tpu_custom_call.1']
    %14 = vsyncpa [#allocation3], 0
    %15 = vsyncpa [#allocation6], 0
    %16 = vsyncpa [#allocation9], 0
    %17 = vsyncpa [#allocation4], 0
    %18 = vsyncpa [#allocation13], 0
    // Predicated region
    $region2: #{tpu_custom_call.1} parent=1 // pred_check
      _
    $region3: #{tpu_custom_call.1} parent=1 // pred_check_branch
      %20 = sbr.rel (0) target = $region5
    $region4: #{tpu_custom_call.1} parent=1 // pred_region
      %22 = vsyncadd [#allocation3], 0
      %s24 = sshll.u32 %s0, 4
      %s25 = int_to_ptr.hbm [resolvable:$true] %s24
      %s26 = sshll.u32 [#allocation2], 4
      %s27 = int_to_ptr.vmem [resolvable:$true] %s26
      %29 = dma.hbm_to_vmem [thread:$0]  %s25, 128, %s27, [#allocation3]
    $region5: #{tpu_custom_call.1} parent=1 // pred_fallthru
      _
    // Predicated region
    $region6: #{tpu_custom_call.1} parent=1 // pred_check
      _
    $region7: #{tpu_custom_call.1} parent=1 // pred_check_branch
      %31 = sbr.rel (0) target = $region9
    $region8: #{tpu_custom_call.1} parent=1 // pred_region
      %33 = vsyncadd [#allocation6], 0
      %s34 = sshll.u32 %s1, 4
      %s35 = int_to_ptr.hbm [resolvable:$true] %s34
      %s36 = sshll.u32 [#allocation5], 4
      %s37 = int_to_ptr.vmem [resolvable:$true] %s36
      %42 = dma.hbm_to_vmem [thread:$0]  %s35, 8192, %s37, [#allocation6], 64, 64, 4
    $region9: #{tpu_custom_call.1} parent=1 // pred_fallthru
      _
    // Predicated region
    $region10: #{tpu_custom_call.1} parent=1 // pred_check
      _
    $region11: #{tpu_custom_call.1} parent=1 // pred_check_branch
      %44 = sbr.rel (0) target = $region13
    $region12: #{tpu_custom_call.1} parent=1 // pred_region
      _
    $region13: #{tpu_custom_call.1} parent=1 // pred_fallthru
      _
    // Predicated region
    $region14: #{tpu_custom_call.1} parent=1 // pred_check
      _
    $region15: #{tpu_custom_call.1} parent=1 // pred_check_branch
      %46 = sbr.rel (0) target = $region17
    $region16: #{tpu_custom_call.1} parent=1 // pred_region
      %48 = vsyncadd [#allocation6], 0
      %s49 = sshll.u32 %s3, 4
      %s50 = int_to_ptr.hbm [resolvable:$true] %s49
      %s51 = sshll.u32 [#allocation7], 4
      %s52 = int_to_ptr.vmem [resolvable:$true] %s51
      %57 = dma.hbm_to_vmem [thread:$0]  %s50, 2048, %s52, [#allocation6], 128, 128, 8
    $region17: #{tpu_custom_call.1} parent=1 // pred_fallthru
      _
    // Predicated region
    $region18: #{tpu_custom_call.1} parent=1 // pred_check
      _
    $region19: #{tpu_custom_call.1} parent=1 // pred_check_branch
      %59 = sbr.rel (0) target = $region21
    $region20: #{tpu_custom_call.1} parent=1 // pred_region
      _
    $region21: #{tpu_custom_call.1} parent=1 // pred_fallthru
      _
    // Predicated region
    $region22: #{tpu_custom_call.1} parent=1 // pred_check
      _
    $region23: #{tpu_custom_call.1} parent=1 // pred_check_branch
      %61 = sbr.rel (0) target = $region25
    $region24: #{tpu_custom_call.1} parent=1 // pred_region
      %63 = vsyncadd [#allocation9], 0
      %s64 = sshll.u32 %s5, 4
      %s65 = int_to_ptr.hbm [resolvable:$true] %s64
      %s66 = sshll.u32 [#allocation8], 4
      %s67 = int_to_ptr.vmem [resolvable:$true] %s66
      %72 = dma.hbm_to_vmem [thread:$0]  %s65, 8192, %s67, [#allocation9], 512, 512, 32
    $region25: #{tpu_custom_call.1} parent=1 // pred_fallthru
      _
    // Predicated region
    $region26: #{tpu_custom_call.1} parent=1 // pred_check
      _
    $region27: #{tpu_custom_call.1} parent=1 // pred_check_branch
      %74 = sbr.rel (0) target = $region29
    $region28: #{tpu_custom_call.1} parent=1 // pred_region
      %76 = vsyncadd [#allocation9], 0
      %s78 = sshll.u32 %s6, 4
      %s79 = int_to_ptr.hbm [resolvable:$true] %s78
      %s80 = sshll.u32 [#allocation10], 4
      %s81 = int_to_ptr.vmem [resolvable:$true] %s80
      %83 = dma.hbm_to_vmem [thread:$0]  %s79, 128, %s81, [#allocation9]
    $region29: #{tpu_custom_call.1} parent=1 // pred_fallthru
      _
    // Predicated region
    $region30: #{tpu_custom_call.1} parent=1 // pred_check
      _
    $region31: #{tpu_custom_call.1} parent=1 // pred_check_branch
      %85 = sbr.rel (0) target = $region33
    $region32: #{tpu_custom_call.1} parent=1 // pred_region
      %87 = dma.done [#allocation3], 128
    $region33: #{tpu_custom_call.1} parent=1 // pred_fallthru
      _
    // Predicated region
    $region34: #{tpu_custom_call.1} parent=1 // pred_check
      _
    $region35: #{tpu_custom_call.1} parent=1 // pred_check_branch
      %89 = sbr.rel (0) target = $region37
    $region36: #{tpu_custom_call.1} parent=1 // pred_region
      %91 = dma.done [#allocation6], 8192
    $region37: #{tpu_custom_call.1} parent=1 // pred_fallthru
      _
    // Predicated region
    $region38: #{tpu_custom_call.1} parent=1 // pred_check
      _
    $region39: #{tpu_custom_call.1} parent=1 // pred_check_branch
      %93 = sbr.rel (0) target = $region41
    $region40: #{tpu_custom_call.1} parent=1 // pred_region
      %95 = dma.done [#allocation6], 2048
    $region41: #{tpu_custom_call.1} parent=1 // pred_fallthru
      _
    // Predicated region
    $region42: #{tpu_custom_call.1} parent=1 // pred_check
      _
    $region43: #{tpu_custom_call.1} parent=1 // pred_check_branch
      %97 = sbr.rel (0) target = $region45
    $region44: #{tpu_custom_call.1} parent=1 // pred_region
      %99 = dma.done [#allocation9], 8192
    $region45: #{tpu_custom_call.1} parent=1 // pred_fallthru
      _
    // Predicated region
    $region46: #{tpu_custom_call.1} parent=1 // pred_check
      _
    $region47: #{tpu_custom_call.1} parent=1 // pred_check_branch
      %101 = sbr.rel (0) target = $region49
    $region48: #{tpu_custom_call.1} parent=1 // pred_region
      %103 = dma.done [#allocation9], 128
    $region49: #{tpu_custom_call.1} parent=1 // pred_fallthru
      _
    %v104 = vld [vmem:[#allocation2] sm:$0xff]
    %v105 = vld [vmem:[#allocation5] sm:$0xf]
    %v106 = vld [vmem:[#allocation5 + $0x4] sm:$0xf]
    %v107 = vld [vmem:[#allocation5 + $0x8] sm:$0xf]
    %v108 = vld [vmem:[#allocation5 + $0xc] sm:$0xf]
    %v109 = vld [vmem:[#allocation5 + $0x10] sm:$0xf]
    %v110 = vld [vmem:[#allocation5 + $0x14] sm:$0xf]
    %v111 = vld [vmem:[#allocation5 + $0x18] sm:$0xf]
    %v112 = vld [vmem:[#allocation5 + $0x1c] sm:$0xf]
    %v113 = vld [vmem:[#allocation5 + $0x20] sm:$0xf]
    %v114 = vld [vmem:[#allocation5 + $0x24] sm:$0xf]
    %v115 = vld [vmem:[#allocation5 + $0x28] sm:$0xf]
    %v116 = vld [vmem:[#allocation5 + $0x2c] sm:$0xf]
    %v117 = vld [vmem:[#allocation5 + $0x30] sm:$0xf]
    %v118 = vld [vmem:[#allocation5 + $0x34] sm:$0xf]
    %v119 = vld [vmem:[#allocation5 + $0x38] sm:$0xf]
    %v120 = vld [vmem:[#allocation5 + $0x3c] sm:$0xf]
    %v121 = vld [vmem:[#allocation5 + $0x40] sm:$0xf]
    %v122 = vld [vmem:[#allocation5 + $0x44] sm:$0xf]
    %v123 = vld [vmem:[#allocation5 + $0x48] sm:$0xf]
    %v124 = vld [vmem:[#allocation5 + $0x4c] sm:$0xf]
    %v125 = vld [vmem:[#allocation5 + $0x50] sm:$0xf]
    %v126 = vld [vmem:[#allocation5 + $0x54] sm:$0xf]
    %v127 = vld [vmem:[#allocation5 + $0x58] sm:$0xf]
    %v128 = vld [vmem:[#allocation5 + $0x5c] sm:$0xf]
    %v129 = vld [vmem:[#allocation5 + $0x60] sm:$0xf]
    %v130 = vld [vmem:[#allocation5 + $0x64] sm:$0xf]
    %v131 = vld [vmem:[#allocation5 + $0x68] sm:$0xf]
    %v132 = vld [vmem:[#allocation5 + $0x6c] sm:$0xf]
    %v133 = vld [vmem:[#allocation5 + $0x70] sm:$0xf]
    %v134 = vld [vmem:[#allocation5 + $0x74] sm:$0xf]
    %v135 = vld [vmem:[#allocation5 + $0x78] sm:$0xf]
    %v136 = vld [vmem:[#allocation5 + $0x7c] sm:$0xf]
    %v137 = vld [vmem:[#allocation5 + $0x80] sm:$0xf]
    %v138 = vld [vmem:[#allocation5 + $0x84] sm:$0xf]
    %v139 = vld [vmem:[#allocation5 + $0x88] sm:$0xf]
    %v140 = vld [vmem:[#allocation5 + $0x8c] sm:$0xf]
    %v141 = vld [vmem:[#allocation5 + $0x90] sm:$0xf]
    %v142 = vld [vmem:[#allocation5 + $0x94] sm:$0xf]
    %v143 = vld [vmem:[#allocation5 + $0x98] sm:$0xf]
    %v144 = vld [vmem:[#allocation5 + $0x9c] sm:$0xf]
    %v145 = vld [vmem:[#allocation5 + $0xa0] sm:$0xf]
    %v146 = vld [vmem:[#allocation5 + $0xa4] sm:$0xf]
    %v147 = vld [vmem:[#allocation5 + $0xa8] sm:$0xf]
    %v148 = vld [vmem:[#allocation5 + $0xac] sm:$0xf]
    %v149 = vld [vmem:[#allocation5 + $0xb0] sm:$0xf]
    %v150 = vld [vmem:[#allocation5 + $0xb4] sm:$0xf]
    %v151 = vld [vmem:[#allocation5 + $0xb8] sm:$0xf]
    %v152 = vld [vmem:[#allocation5 + $0xbc] sm:$0xf]
    %v153 = vld [vmem:[#allocation5 + $0xc0] sm:$0xf]
    %v154 = vld [vmem:[#allocation5 + $0xc4] sm:$0xf]
    %v155 = vld [vmem:[#allocation5 + $0xc8] sm:$0xf]
    %v156 = vld [vmem:[#allocation5 + $0xcc] sm:$0xf]
    %v157 = vld [vmem:[#allocation5 + $0xd0] sm:$0xf]
    %v158 = vld [vmem:[#allocation5 + $0xd4] sm:$0xf]
    %v159 = vld [vmem:[#allocation5 + $0xd8] sm:$0xf]
    %v160 = vld [vmem:[#allocation5 + $0xdc] sm:$0xf]
    %v161 = vld [vmem:[#allocation5 + $0xe0] sm:$0xf]
    %v162 = vld [vmem:[#allocation5 + $0xe4] sm:$0xf]
    %v163 = vld [vmem:[#allocation5 + $0xe8] sm:$0xf]
    %v164 = vld [vmem:[#allocation5 + $0xec] sm:$0xf]
    %v165 = vld [vmem:[#allocation5 + $0xf0] sm:$0xf]
    %v166 = vld [vmem:[#allocation5 + $0xf4] sm:$0xf]
    %v167 = vld [vmem:[#allocation5 + $0xf8] sm:$0xf]
    %v168 = vld [vmem:[#allocation5 + $0xfc] sm:$0xf]
    %v169 = vld [vmem:[#allocation5 + $0x100] sm:$0xf]
    %v170 = vld [vmem:[#allocation5 + $0x104] sm:$0xf]
    %v171 = vld [vmem:[#allocation5 + $0x108] sm:$0xf]
    %v172 = vld [vmem:[#allocation5 + $0x10c] sm:$0xf]
    %v173 = vld [vmem:[#allocation5 + $0x110] sm:$0xf]
    %v174 = vld [vmem:[#allocation5 + $0x114] sm:$0xf]
    %v175 = vld [vmem:[#allocation5 + $0x118] sm:$0xf]
    %v176 = vld [vmem:[#allocation5 + $0x11c] sm:$0xf]
    %v177 = vld [vmem:[#allocation5 + $0x120] sm:$0xf]
    %v178 = vld [vmem:[#allocation5 + $0x124] sm:$0xf]
    %v179 = vld [vmem:[#allocation5 + $0x128] sm:$0xf]
    %v180 = vld [vmem:[#allocation5 + $0x12c] sm:$0xf]
    %v181 = vld [vmem:[#allocation5 + $0x130] sm:$0xf]
    %v182 = vld [vmem:[#allocation5 + $0x134] sm:$0xf]
    %v183 = vld [vmem:[#allocation5 + $0x138] sm:$0xf]
    %v184 = vld [vmem:[#allocation5 + $0x13c] sm:$0xf]
    %v185 = vld [vmem:[#allocation5 + $0x140] sm:$0xf]
    %v186 = vld [vmem:[#allocation5 + $0x144] sm:$0xf]
    %v187 = vld [vmem:[#allocation5 + $0x148] sm:$0xf]
    %v188 = vld [vmem:[#allocation5 + $0x14c] sm:$0xf]
    %v189 = vld [vmem:[#allocation5 + $0x150] sm:$0xf]
    %v190 = vld [vmem:[#allocation5 + $0x154] sm:$0xf]
    %v191 = vld [vmem:[#allocation5 + $0x158] sm:$0xf]
    %v192 = vld [vmem:[#allocation5 + $0x15c] sm:$0xf]
    %v193 = vld [vmem:[#allocation5 + $0x160] sm:$0xf]
    %v194 = vld [vmem:[#allocation5 + $0x164] sm:$0xf]
    %v195 = vld [vmem:[#allocation5 + $0x168] sm:$0xf]
    %v196 = vld [vmem:[#allocation5 + $0x16c] sm:$0xf]
    %v197 = vld [vmem:[#allocation5 + $0x170] sm:$0xf]
    %v198 = vld [vmem:[#allocation5 + $0x174] sm:$0xf]
    %v199 = vld [vmem:[#allocation5 + $0x178] sm:$0xf]
    %v200 = vld [vmem:[#allocation5 + $0x17c] sm:$0xf]
    %v201 = vld [vmem:[#allocation5 + $0x180] sm:$0xf]
    %v202 = vld [vmem:[#allocation5 + $0x184] sm:$0xf]
    %v203 = vld [vmem:[#allocation5 + $0x188] sm:$0xf]
    %v204 = vld [vmem:[#allocation5 + $0x18c] sm:$0xf]
    %v205 = vld [vmem:[#allocation5 + $0x190] sm:$0xf]
    %v206 = vld [vmem:[#allocation5 + $0x194] sm:$0xf]
    %v207 = vld [vmem:[#allocation5 + $0x198] sm:$0xf]
    %v208 = vld [vmem:[#allocation5 + $0x19c] sm:$0xf]
    %v209 = vld [vmem:[#allocation5 + $0x1a0] sm:$0xf]
    %v210 = vld [vmem:[#allocation5 + $0x1a4] sm:$0xf]
    %v211 = vld [vmem:[#allocation5 + $0x1a8] sm:$0xf]
    %v212 = vld [vmem:[#allocation5 + $0x1ac] sm:$0xf]
    %v213 = vld [vmem:[#allocation5 + $0x1b0] sm:$0xf]
    %v214 = vld [vmem:[#allocation5 + $0x1b4] sm:$0xf]
    %v215 = vld [vmem:[#allocation5 + $0x1b8] sm:$0xf]
    %v216 = vld [vmem:[#allocation5 + $0x1bc] sm:$0xf]
    %v217 = vld [vmem:[#allocation5 + $0x1c0] sm:$0xf]
    %v218 = vld [vmem:[#allocation5 + $0x1c4] sm:$0xf]
    %v219 = vld [vmem:[#allocation5 + $0x1c8] sm:$0xf]
    %v220 = vld [vmem:[#allocation5 + $0x1cc] sm:$0xf]
    %v221 = vld [vmem:[#allocation5 + $0x1d0] sm:$0xf]
    %v222 = vld [vmem:[#allocation5 + $0x1d4] sm:$0xf]
    %v223 = vld [vmem:[#allocation5 + $0x1d8] sm:$0xf]
    %v224 = vld [vmem:[#allocation5 + $0x1dc] sm:$0xf]
    %v225 = vld [vmem:[#allocation5 + $0x1e0] sm:$0xf]
    %v226 = vld [vmem:[#allocation5 + $0x1e4] sm:$0xf]
    %v227 = vld [vmem:[#allocation5 + $0x1e8] sm:$0xf]
    %v228 = vld [vmem:[#allocation5 + $0x1ec] sm:$0xf]
    %v229 = vld [vmem:[#allocation5 + $0x1f0] sm:$0xf]
    %v230 = vld [vmem:[#allocation5 + $0x1f4] sm:$0xf]
    %v231 = vld [vmem:[#allocation5 + $0x1f8] sm:$0xf]
    %v232 = vld [vmem:[#allocation5 + $0x1fc] sm:$0xf]
    %v233 = vld [vmem:[%s2] sm:$0x1]
    %v235 = vperm.slane %v233, 0
    %238 = vst [vmem:[#allocation1] ss:$9 sm:$0xff] %v104
    %v239 = vld [vmem:[#allocation1] sm:$0xff]
    %v240 = vld [vmem:[#allocation1 + $0x9] sm:$0xff]
    %v241 = vld [vmem:[#allocation1 + $0x12] sm:$0xff]
    %v242 = vld [vmem:[#allocation1 + $0x1b] sm:$0xff]
    %v243 = vld [vmem:[#allocation1 + $0x24] sm:$0xff]
    %v244 = vld [vmem:[#allocation1 + $0x2d] sm:$0xff]
    %v245 = vld [vmem:[#allocation1 + $0x36] sm:$0xff]
    %v246 = vld [vmem:[#allocation1 + $0x3f] sm:$0xff]
    %v383 = vunpack.c.l.b16 %v105
    %v384 = vunpack.c.l.b16 %v106
    %v385 = vunpack.c.l.b16 %v107
    %v386 = vunpack.c.l.b16 %v108
    %v387 = vunpack.c.l.b16 %v109
    %v388 = vunpack.c.l.b16 %v110
    %v389 = vunpack.c.l.b16 %v111
    %v390 = vunpack.c.l.b16 %v112
    %v391 = vunpack.c.l.b16 %v113
    %v392 = vunpack.c.l.b16 %v114
    %v393 = vunpack.c.l.b16 %v115
    %v394 = vunpack.c.l.b16 %v116
    %v395 = vunpack.c.l.b16 %v117
    %v396 = vunpack.c.l.b16 %v118
    %v397 = vunpack.c.l.b16 %v119
    %v398 = vunpack.c.l.b16 %v120
    %v399 = vunpack.c.l.b16 %v121
    %v400 = vunpack.c.l.b16 %v122
    %v401 = vunpack.c.l.b16 %v123
    %v402 = vunpack.c.l.b16 %v124
    %v403 = vunpack.c.l.b16 %v125
    %v404 = vunpack.c.l.b16 %v126
    %v405 = vunpack.c.l.b16 %v127
    %v406 = vunpack.c.l.b16 %v128
    %v407 = vunpack.c.l.b16 %v129
    %v408 = vunpack.c.l.b16 %v130
    %v409 = vunpack.c.l.b16 %v131
    %v410 = vunpack.c.l.b16 %v132
    %v411 = vunpack.c.l.b16 %v133
    %v412 = vunpack.c.l.b16 %v134
    %v413 = vunpack.c.l.b16 %v135
    %v414 = vunpack.c.l.b16 %v136
    %v415 = vunpack.c.l.b16 %v137
    %v416 = vunpack.c.l.b16 %v138
    %v417 = vunpack.c.l.b16 %v139
    %v418 = vunpack.c.l.b16 %v140
    %v419 = vunpack.c.l.b16 %v141
    %v420 = vunpack.c.l.b16 %v142
    %v421 = vunpack.c.l.b16 %v143
    %v422 = vunpack.c.l.b16 %v144
    %v423 = vunpack.c.l.b16 %v145
    %v424 = vunpack.c.l.b16 %v146
    %v425 = vunpack.c.l.b16 %v147
    %v426 = vunpack.c.l.b16 %v148
    %v427 = vunpack.c.l.b16 %v149
    %v428 = vunpack.c.l.b16 %v150
    %v429 = vunpack.c.l.b16 %v151
    %v430 = vunpack.c.l.b16 %v152
    %v431 = vunpack.c.l.b16 %v153
    %v432 = vunpack.c.l.b16 %v154
    %v433 = vunpack.c.l.b16 %v155
    %v434 = vunpack.c.l.b16 %v156
    %v435 = vunpack.c.l.b16 %v157
    %v436 = vunpack.c.l.b16 %v158
    %v437 = vunpack.c.l.b16 %v159
    %v438 = vunpack.c.l.b16 %v160
    %v439 = vunpack.c.l.b16 %v161
    %v440 = vunpack.c.l.b16 %v162
    %v441 = vunpack.c.l.b16 %v163
    %v442 = vunpack.c.l.b16 %v164
    %v443 = vunpack.c.l.b16 %v165
    %v444 = vunpack.c.l.b16 %v166
    %v445 = vunpack.c.l.b16 %v167
    %v446 = vunpack.c.l.b16 %v168
    %v447 = vunpack.c.l.b16 %v169
    %v448 = vunpack.c.l.b16 %v170
    %v449 = vunpack.c.l.b16 %v171
    %v450 = vunpack.c.l.b16 %v172
    %v451 = vunpack.c.l.b16 %v173
    %v452 = vunpack.c.l.b16 %v174
    %v453 = vunpack.c.l.b16 %v175
    %v454 = vunpack.c.l.b16 %v176
    %v455 = vunpack.c.l.b16 %v177
    %v456 = vunpack.c.l.b16 %v178
    %v457 = vunpack.c.l.b16 %v179
    %v458 = vunpack.c.l.b16 %v180
    %v459 = vunpack.c.l.b16 %v181
    %v460 = vunpack.c.l.b16 %v182
    %v461 = vunpack.c.l.b16 %v183
    %v462 = vunpack.c.l.b16 %v184
    %v463 = vunpack.c.l.b16 %v185
    %v464 = vunpack.c.l.b16 %v186
    %v465 = vunpack.c.l.b16 %v187
    %v466 = vunpack.c.l.b16 %v188
    %v467 = vunpack.c.l.b16 %v189
    %v468 = vunpack.c.l.b16 %v190
    %v469 = vunpack.c.l.b16 %v191
    %v470 = vunpack.c.l.b16 %v192
    %v471 = vunpack.c.l.b16 %v193
    %v472 = vunpack.c.l.b16 %v194
    %v473 = vunpack.c.l.b16 %v195
    %v474 = vunpack.c.l.b16 %v196
    %v475 = vunpack.c.l.b16 %v197
    %v476 = vunpack.c.l.b16 %v198
    %v477 = vunpack.c.l.b16 %v199
    %v478 = vunpack.c.l.b16 %v200
    %v479 = vunpack.c.l.b16 %v201
    %v480 = vunpack.c.l.b16 %v202
    %v481 = vunpack.c.l.b16 %v203
    %v482 = vunpack.c.l.b16 %v204
    %v483 = vunpack.c.l.b16 %v205
    %v484 = vunpack.c.l.b16 %v206
    %v485 = vunpack.c.l.b16 %v207
    %v486 = vunpack.c.l.b16 %v208
    %v487 = vunpack.c.l.b16 %v209
    %v488 = vunpack.c.l.b16 %v210
    %v489 = vunpack.c.l.b16 %v211
    %v490 = vunpack.c.l.b16 %v212
    %v491 = vunpack.c.l.b16 %v213
    %v492 = vunpack.c.l.b16 %v214
    %v493 = vunpack.c.l.b16 %v215
    %v494 = vunpack.c.l.b16 %v216
    %v495 = vunpack.c.l.b16 %v217
    %v496 = vunpack.c.l.b16 %v218
    %v497 = vunpack.c.l.b16 %v219
    %v498 = vunpack.c.l.b16 %v220
    %v499 = vunpack.c.l.b16 %v221
    %v500 = vunpack.c.l.b16 %v222
    %v501 = vunpack.c.l.b16 %v223
    %v502 = vunpack.c.l.b16 %v224
    %v503 = vunpack.c.l.b16 %v225
    %v504 = vunpack.c.l.b16 %v226
    %v505 = vunpack.c.l.b16 %v227
    %v506 = vunpack.c.l.b16 %v228
    %v507 = vunpack.c.l.b16 %v229
    %v508 = vunpack.c.l.b16 %v230
    %v509 = vunpack.c.l.b16 %v231
    %v510 = vunpack.c.l.b16 %v232
    %v511 = vpack.c.b16 %v384, %v383
    %v512 = vpack.c.b16 %v386, %v385
    %v513 = vpack.c.b16 %v388, %v387
    %v514 = vpack.c.b16 %v390, %v389
    %v515 = vpack.c.b16 %v392, %v391
    %v516 = vpack.c.b16 %v394, %v393
    %v517 = vpack.c.b16 %v396, %v395
    %v518 = vpack.c.b16 %v398, %v397
    %v519 = vpack.c.b16 %v400, %v399
    %v520 = vpack.c.b16 %v402, %v401
    %v521 = vpack.c.b16 %v404, %v403
    %v522 = vpack.c.b16 %v406, %v405
    %v523 = vpack.c.b16 %v408, %v407
    %v524 = vpack.c.b16 %v410, %v409
    %v525 = vpack.c.b16 %v412, %v411
    %v526 = vpack.c.b16 %v414, %v413
    %v527 = vpack.c.b16 %v416, %v415
    %v528 = vpack.c.b16 %v418, %v417
    %v529 = vpack.c.b16 %v420, %v419
    %v530 = vpack.c.b16 %v422, %v421
    %v531 = vpack.c.b16 %v424, %v423
    %v532 = vpack.c.b16 %v426, %v425
    %v533 = vpack.c.b16 %v428, %v427
    %v534 = vpack.c.b16 %v430, %v429
    %v535 = vpack.c.b16 %v432, %v431
    %v536 = vpack.c.b16 %v434, %v433
    %v537 = vpack.c.b16 %v436, %v435
    %v538 = vpack.c.b16 %v438, %v437
    %v539 = vpack.c.b16 %v440, %v439
    %v540 = vpack.c.b16 %v442, %v441
    %v541 = vpack.c.b16 %v444, %v443
    %v542 = vpack.c.b16 %v446, %v445
    %v543 = vpack.c.b16 %v448, %v447
    %v544 = vpack.c.b16 %v450, %v449
    %v545 = vpack.c.b16 %v452, %v451
    %v546 = vpack.c.b16 %v454, %v453
    %v547 = vpack.c.b16 %v456, %v455
    %v548 = vpack.c.b16 %v458, %v457
    %v549 = vpack.c.b16 %v460, %v459
    %v550 = vpack.c.b16 %v462, %v461
    %v551 = vpack.c.b16 %v464, %v463
    %v552 = vpack.c.b16 %v466, %v465
    %v553 = vpack.c.b16 %v468, %v467
    %v554 = vpack.c.b16 %v470, %v469
    %v555 = vpack.c.b16 %v472, %v471
    %v556 = vpack.c.b16 %v474, %v473
    %v557 = vpack.c.b16 %v476, %v475
    %v558 = vpack.c.b16 %v478, %v477
    %v559 = vpack.c.b16 %v480, %v479
    %v560 = vpack.c.b16 %v482, %v481
    %v561 = vpack.c.b16 %v484, %v483
    %v562 = vpack.c.b16 %v486, %v485
    %v563 = vpack.c.b16 %v488, %v487
    %v564 = vpack.c.b16 %v490, %v489
    %v565 = vpack.c.b16 %v492, %v491
    %v566 = vpack.c.b16 %v494, %v493
    %v567 = vpack.c.b16 %v496, %v495
    %v568 = vpack.c.b16 %v498, %v497
    %v569 = vpack.c.b16 %v500, %v499
    %v570 = vpack.c.b16 %v502, %v501
    %v571 = vpack.c.b16 %v504, %v503
    %v572 = vpack.c.b16 %v506, %v505
    %v573 = vpack.c.b16 %v508, %v507
    %v574 = vpack.c.b16 %v510, %v509
    %639 = vmatpush.bf16.msra.mxu0 %v518
    %640 = vmatpush.bf16.msra.mxu0 %v517
    %641 = vmatpush.bf16.msra.mxu0 %v516
    %642 = vmatpush.bf16.msra.mxu0 %v515
    %643 = vmatpush.bf16.msra.mxu0 %v514
    %644 = vmatpush.bf16.msra.mxu0 %v513
    %645 = vmatpush.bf16.msra.mxu0 %v512
    %646 = vmatpush.bf16.msra.mxu0 %v511
    %647 = vmatmul.bf16.gmra.mxu0 %v239
    %v648 = vpop.f32.mrf.mxu0
    %v649 = vadd.f32 %v235, %v648
    %v650 = vpop.f32.mrf.mxu0
    %651 = vdwg.mxu0
    %652 = vmatpush.bf16.msra.mxu0 %v526
    %653 = vmatpush.bf16.msra.mxu0 %v525
    %654 = vmatpush.bf16.msra.mxu0 %v524
    %655 = vmatpush.bf16.msra.mxu0 %v523
    %656 = vmatpush.bf16.msra.mxu0 %v522
    %657 = vmatpush.bf16.msra.mxu0 %v521
    %658 = vmatpush.bf16.msra.mxu0 %v520
    %659 = vmatpush.bf16.msra.mxu0 %v519
    %660 = vmatmul.bf16.gmra.mxu0 %v240
    %v661 = vpop.f32.mrf.mxu0
    %v662 = vadd.f32 %v649, %v661
    %v663 = vpop.f32.mrf.mxu0
    %664 = vdwg.mxu0
    %665 = vmatpush.bf16.msra.mxu0 %v534
    %666 = vmatpush.bf16.msra.mxu0 %v533
    %667 = vmatpush.bf16.msra.mxu0 %v532
    %668 = vmatpush.bf16.msra.mxu0 %v531
    %669 = vmatpush.bf16.msra.mxu0 %v530
    %670 = vmatpush.bf16.msra.mxu0 %v529
    %671 = vmatpush.bf16.msra.mxu0 %v528
    %672 = vmatpush.bf16.msra.mxu0 %v527
    %673 = vmatmul.bf16.gmra.mxu0 %v241
    %v674 = vpop.f32.mrf.mxu0
    %v675 = vadd.f32 %v662, %v674
    %v676 = vpop.f32.mrf.mxu0
    %677 = vdwg.mxu0
    %678 = vmatpush.bf16.msra.mxu0 %v542
    %679 = vmatpush.bf16.msra.mxu0 %v541
    %680 = vmatpush.bf16.msra.mxu0 %v540
    %681 = vmatpush.bf16.msra.mxu0 %v539
    %682 = vmatpush.bf16.msra.mxu0 %v538
    %683 = vmatpush.bf16.msra.mxu0 %v537
    %684 = vmatpush.bf16.msra.mxu0 %v536
    %685 = vmatpush.bf16.msra.mxu0 %v535
    %686 = vmatmul.bf16.gmra.mxu0 %v242
    %v687 = vpop.f32.mrf.mxu0
    %v688 = vadd.f32 %v675, %v687
    %v689 = vpop.f32.mrf.mxu0
    %690 = vdwg.mxu0
    %691 = vmatpush.bf16.msra.mxu0 %v550
    %692 = vmatpush.bf16.msra.mxu0 %v549
    %693 = vmatpush.bf16.msra.mxu0 %v548
    %694 = vmatpush.bf16.msra.mxu0 %v547
    %695 = vmatpush.bf16.msra.mxu0 %v546
    %696 = vmatpush.bf16.msra.mxu0 %v545
    %697 = vmatpush.bf16.msra.mxu0 %v544
    %698 = vmatpush.bf16.msra.mxu0 %v543
    %699 = vmatmul.bf16.gmra.mxu0 %v243
    %v700 = vpop.f32.mrf.mxu0
    %v701 = vadd.f32 %v688, %v700
    %v702 = vpop.f32.mrf.mxu0
    %703 = vdwg.mxu0
    %704 = vmatpush.bf16.msra.mxu0 %v558
    %705 = vmatpush.bf16.msra.mxu0 %v557
    %706 = vmatpush.bf16.msra.mxu0 %v556
    %707 = vmatpush.bf16.msra.mxu0 %v555
    %708 = vmatpush.bf16.msra.mxu0 %v554
    %709 = vmatpush.bf16.msra.mxu0 %v553
    %710 = vmatpush.bf16.msra.mxu0 %v552
    %711 = vmatpush.bf16.msra.mxu0 %v551
    %712 = vmatmul.bf16.gmra.mxu0 %v244
    %v713 = vpop.f32.mrf.mxu0
    %v714 = vadd.f32 %v701, %v713
    %v715 = vpop.f32.mrf.mxu0
    %716 = vdwg.mxu0
    %717 = vmatpush.bf16.msra.mxu0 %v566
    %718 = vmatpush.bf16.msra.mxu0 %v565
    %719 = vmatpush.bf16.msra.mxu0 %v564
    %720 = vmatpush.bf16.msra.mxu0 %v563
    %721 = vmatpush.bf16.msra.mxu0 %v562
    %722 = vmatpush.bf16.msra.mxu0 %v561
    %723 = vmatpush.bf16.msra.mxu0 %v560
    %724 = vmatpush.bf16.msra.mxu0 %v559
    %725 = vmatmul.bf16.gmra.mxu0 %v245
    %v726 = vpop.f32.mrf.mxu0
    %v727 = vadd.f32 %v714, %v726
    %v728 = vpop.f32.mrf.mxu0
    %729 = vdwg.mxu0
    %730 = vmatpush.bf16.msra.mxu0 %v574
    %731 = vmatpush.bf16.msra.mxu0 %v573
    %732 = vmatpush.bf16.msra.mxu0 %v572
    %733 = vmatpush.bf16.msra.mxu0 %v571
    %734 = vmatpush.bf16.msra.mxu0 %v570
    %735 = vmatpush.bf16.msra.mxu0 %v569
    %736 = vmatpush.bf16.msra.mxu0 %v568
    %737 = vmatpush.bf16.msra.mxu0 %v567
    %738 = vmatmul.bf16.gmra.mxu0 %v246
    %v739 = vpop.f32.mrf.mxu0
    %v740 = vadd.f32 %v727, %v739
    %v741 = vpop.f32.mrf.mxu0
    %742 = vdwg.mxu0
    %v743 = vmax.f32 %v740, 0.0
    %v744 = vpack.c.bf16 %v743, %v743
    %v745 = vld [vmem:[#allocation7] sm:$0xff]
    %v746 = vld [vmem:[#allocation7 + $0x8] sm:$0xff]
    %v747 = vld [vmem:[#allocation7 + $0x10] sm:$0xff]
    %v748 = vld [vmem:[#allocation7 + $0x18] sm:$0xff]
    %v749 = vld [vmem:[#allocation7 + $0x20] sm:$0xff]
    %v750 = vld [vmem:[#allocation7 + $0x28] sm:$0xff]
    %v751 = vld [vmem:[#allocation7 + $0x30] sm:$0xff]
    %v752 = vld [vmem:[#allocation7 + $0x38] sm:$0xff]
    %v753 = vld [vmem:[#allocation7 + $0x40] sm:$0xff]
    %v754 = vld [vmem:[#allocation7 + $0x48] sm:$0xff]
    %v755 = vld [vmem:[#allocation7 + $0x50] sm:$0xff]
    %v756 = vld [vmem:[#allocation7 + $0x58] sm:$0xff]
    %v757 = vld [vmem:[#allocation7 + $0x60] sm:$0xff]
    %v758 = vld [vmem:[#allocation7 + $0x68] sm:$0xff]
    %v759 = vld [vmem:[#allocation7 + $0x70] sm:$0xff]
    %v760 = vld [vmem:[#allocation7 + $0x78] sm:$0xff]
    %v761 = vld [vmem:[%s4] sm:$0x3]
    %v763 = vperm.slane %v761, 0
    %v764 = vperm.slane %v761, 1
    %v783 = vunpack.c.l.b16 %v745
    %v784 = vunpack.c.h.b16 %v745
    %v785 = vunpack.c.l.b16 %v746
    %v786 = vunpack.c.h.b16 %v746
    %v787 = vunpack.c.l.b16 %v747
    %v788 = vunpack.c.h.b16 %v747
    %v789 = vunpack.c.l.b16 %v748
    %v790 = vunpack.c.h.b16 %v748
    %v791 = vunpack.c.l.b16 %v749
    %v792 = vunpack.c.h.b16 %v749
    %v793 = vunpack.c.l.b16 %v750
    %v794 = vunpack.c.h.b16 %v750
    %v795 = vunpack.c.l.b16 %v751
    %v796 = vunpack.c.h.b16 %v751
    %v797 = vunpack.c.l.b16 %v752
    %v798 = vunpack.c.h.b16 %v752
    %v799 = vunpack.c.l.b16 %v753
    %v800 = vunpack.c.h.b16 %v753
    %v801 = vunpack.c.l.b16 %v754
    %v802 = vunpack.c.h.b16 %v754
    %v803 = vunpack.c.l.b16 %v755
    %v804 = vunpack.c.h.b16 %v755
    %v805 = vunpack.c.l.b16 %v756
    %v806 = vunpack.c.h.b16 %v756
    %v807 = vunpack.c.l.b16 %v757
    %v808 = vunpack.c.h.b16 %v757
    %v809 = vunpack.c.l.b16 %v758
    %v810 = vunpack.c.h.b16 %v758
    %v811 = vunpack.c.l.b16 %v759
    %v812 = vunpack.c.h.b16 %v759
    %v813 = vunpack.c.l.b16 %v760
    %v814 = vunpack.c.h.b16 %v760
    %v815 = vpack.c.b16 %v785, %v783
    %v816 = vpack.c.b16 %v786, %v784
    %v817 = vpack.c.b16 %v789, %v787
    %v818 = vpack.c.b16 %v790, %v788
    %v819 = vpack.c.b16 %v793, %v791
    %v820 = vpack.c.b16 %v794, %v792
    %v821 = vpack.c.b16 %v797, %v795
    %v822 = vpack.c.b16 %v798, %v796
    %v823 = vpack.c.b16 %v801, %v799
    %v824 = vpack.c.b16 %v802, %v800
    %v825 = vpack.c.b16 %v805, %v803
    %v826 = vpack.c.b16 %v806, %v804
    %v827 = vpack.c.b16 %v809, %v807
    %v828 = vpack.c.b16 %v810, %v808
    %v829 = vpack.c.b16 %v813, %v811
    %v830 = vpack.c.b16 %v814, %v812
    %847 = vmatpush.bf16.msra.mxu0 %v829
    %848 = vmatpush.bf16.msra.mxu0 %v827
    %849 = vmatpush.bf16.msra.mxu0 %v825
    %850 = vmatpush.bf16.msra.mxu0 %v823
    %851 = vmatpush.bf16.msra.mxu0 %v821
    %852 = vmatpush.bf16.msra.mxu0 %v819
    %853 = vmatpush.bf16.msra.mxu0 %v817
    %854 = vmatpush.bf16.msra.mxu0 %v815
    %855 = vmatmul.bf16.gmra.mxu0 %v744
    %v856 = vpop.f32.mrf.mxu0
    %v857 = vadd.f32 %v763, %v856
    %v858 = vpop.f32.mrf.mxu0
    %859 = vdwg.mxu0
    %860 = vmatpush.bf16.msra.mxu0 %v830
    %861 = vmatpush.bf16.msra.mxu0 %v828
    %862 = vmatpush.bf16.msra.mxu0 %v826
    %863 = vmatpush.bf16.msra.mxu0 %v824
    %864 = vmatpush.bf16.msra.mxu0 %v822
    %865 = vmatpush.bf16.msra.mxu0 %v820
    %866 = vmatpush.bf16.msra.mxu0 %v818
    %867 = vmatpush.bf16.msra.mxu0 %v816
    %868 = vmatmul.bf16.gmra.mxu0 %v744
    %v869 = vpop.f32.mrf.mxu0
    %v870 = vadd.f32 %v764, %v869
    %v871 = vpop.f32.mrf.mxu0
    %872 = vdwg.mxu0
    %v873 = vpack.c.bf16 %v857, %v857
    %874 = vst [vmem:[#allocation12] sm:$0x1] %v873
    %v875 = vmax.f32 %v870, 0.0
    %v876 = vpack.c.bf16 %v875, %v875
    %v877 = vld [vmem:[#allocation8] sm:$0xff]
    %v878 = vld [vmem:[#allocation8 + $0x8] sm:$0xff]
    %v879 = vld [vmem:[#allocation8 + $0x10] sm:$0xff]
    %v880 = vld [vmem:[#allocation8 + $0x18] sm:$0xff]
    %v881 = vld [vmem:[#allocation8 + $0x20] sm:$0xff]
    %v882 = vld [vmem:[#allocation8 + $0x28] sm:$0xff]
    %v883 = vld [vmem:[#allocation8 + $0x30] sm:$0xff]
    %v884 = vld [vmem:[#allocation8 + $0x38] sm:$0xff]
    %v885 = vld [vmem:[#allocation8 + $0x40] sm:$0xff]
    %v886 = vld [vmem:[#allocation8 + $0x48] sm:$0xff]
    %v887 = vld [vmem:[#allocation8 + $0x50] sm:$0xff]
    %v888 = vld [vmem:[#allocation8 + $0x58] sm:$0xff]
    %v889 = vld [vmem:[#allocation8 + $0x60] sm:$0xff]
    %v890 = vld [vmem:[#allocation8 + $0x68] sm:$0xff]
    %v891 = vld [vmem:[#allocation8 + $0x70] sm:$0xff]
    %v892 = vld [vmem:[#allocation8 + $0x78] sm:$0xff]
    %v893 = vld [vmem:[#allocation8 + $0x80] sm:$0xff]
    %v894 = vld [vmem:[#allocation8 + $0x88] sm:$0xff]
    %v895 = vld [vmem:[#allocation8 + $0x90] sm:$0xff]
    %v896 = vld [vmem:[#allocation8 + $0x98] sm:$0xff]
    %v897 = vld [vmem:[#allocation8 + $0xa0] sm:$0xff]
    %v898 = vld [vmem:[#allocation8 + $0xa8] sm:$0xff]
    %v899 = vld [vmem:[#allocation8 + $0xb0] sm:$0xff]
    %v900 = vld [vmem:[#allocation8 + $0xb8] sm:$0xff]
    %v901 = vld [vmem:[#allocation8 + $0xc0] sm:$0xff]
    %v902 = vld [vmem:[#allocation8 + $0xc8] sm:$0xff]
    %v903 = vld [vmem:[#allocation8 + $0xd0] sm:$0xff]
    %v904 = vld [vmem:[#allocation8 + $0xd8] sm:$0xff]
    %v905 = vld [vmem:[#allocation8 + $0xe0] sm:$0xff]
    %v906 = vld [vmem:[#allocation8 + $0xe8] sm:$0xff]
    %v907 = vld [vmem:[#allocation8 + $0xf0] sm:$0xff]
    %v908 = vld [vmem:[#allocation8 + $0xf8] sm:$0xff]
    %v909 = vld [vmem:[#allocation8 + $0x100] sm:$0xff]
    %v910 = vld [vmem:[#allocation8 + $0x108] sm:$0xff]
    %v911 = vld [vmem:[#allocation8 + $0x110] sm:$0xff]
    %v912 = vld [vmem:[#allocation8 + $0x118] sm:$0xff]
    %v913 = vld [vmem:[#allocation8 + $0x120] sm:$0xff]
    %v914 = vld [vmem:[#allocation8 + $0x128] sm:$0xff]
    %v915 = vld [vmem:[#allocation8 + $0x130] sm:$0xff]
    %v916 = vld [vmem:[#allocation8 + $0x138] sm:$0xff]
    %v917 = vld [vmem:[#allocation8 + $0x140] sm:$0xff]
    %v918 = vld [vmem:[#allocation8 + $0x148] sm:$0xff]
    %v919 = vld [vmem:[#allocation8 + $0x150] sm:$0xff]
    %v920 = vld [vmem:[#allocation8 + $0x158] sm:$0xff]
    %v921 = vld [vmem:[#allocation8 + $0x160] sm:$0xff]
    %v922 = vld [vmem:[#allocation8 + $0x168] sm:$0xff]
    %v923 = vld [vmem:[#allocation8 + $0x170] sm:$0xff]
    %v924 = vld [vmem:[#allocation8 + $0x178] sm:$0xff]
    %v925 = vld [vmem:[#allocation8 + $0x180] sm:$0xff]
    %v926 = vld [vmem:[#allocation8 + $0x188] sm:$0xff]
    %v927 = vld [vmem:[#allocation8 + $0x190] sm:$0xff]
    %v928 = vld [vmem:[#allocation8 + $0x198] sm:$0xff]
    %v929 = vld [vmem:[#allocation8 + $0x1a0] sm:$0xff]
    %v930 = vld [vmem:[#allocation8 + $0x1a8] sm:$0xff]
    %v931 = vld [vmem:[#allocation8 + $0x1b0] sm:$0xff]
    %v932 = vld [vmem:[#allocation8 + $0x1b8] sm:$0xff]
    %v933 = vld [vmem:[#allocation8 + $0x1c0] sm:$0xff]
    %v934 = vld [vmem:[#allocation8 + $0x1c8] sm:$0xff]
    %v935 = vld [vmem:[#allocation8 + $0x1d0] sm:$0xff]
    %v936 = vld [vmem:[#allocation8 + $0x1d8] sm:$0xff]
    %v937 = vld [vmem:[#allocation8 + $0x1e0] sm:$0xff]
    %v938 = vld [vmem:[#allocation8 + $0x1e8] sm:$0xff]
    %v939 = vld [vmem:[#allocation8 + $0x1f0] sm:$0xff]
    %v940 = vld [vmem:[#allocation8 + $0x1f8] sm:$0xff]
    %v941 = vld [vmem:[#allocation10] sm:$0xff]
    %v943 = vperm.slane %v941, 0
    %v944 = vperm.slane %v941, 1
    %v945 = vperm.slane %v941, 2
    %v946 = vperm.slane %v941, 3
    %v947 = vperm.slane %v941, 4
    %v948 = vperm.slane %v941, 5
    %v949 = vperm.slane %v941, 6
    %v950 = vperm.slane %v941, 7
    %v1023 = vunpack.c.l.b16 %v877
    %v1024 = vunpack.c.h.b16 %v877
    %v1025 = vunpack.c.l.b16 %v878
    %v1026 = vunpack.c.h.b16 %v878
    %v1027 = vunpack.c.l.b16 %v879
    %v1028 = vunpack.c.h.b16 %v879
    %v1029 = vunpack.c.l.b16 %v880
    %v1030 = vunpack.c.h.b16 %v880
    %v1031 = vunpack.c.l.b16 %v881
    %v1032 = vunpack.c.h.b16 %v881
    %v1033 = vunpack.c.l.b16 %v882
    %v1034 = vunpack.c.h.b16 %v882
    %v1035 = vunpack.c.l.b16 %v883
    %v1036 = vunpack.c.h.b16 %v883
    %v1037 = vunpack.c.l.b16 %v884
    %v1038 = vunpack.c.h.b16 %v884
    %v1039 = vunpack.c.l.b16 %v885
    %v1040 = vunpack.c.h.b16 %v885
    %v1041 = vunpack.c.l.b16 %v886
    %v1042 = vunpack.c.h.b16 %v886
    %v1043 = vunpack.c.l.b16 %v887
    %v1044 = vunpack.c.h.b16 %v887
    %v1045 = vunpack.c.l.b16 %v888
    %v1046 = vunpack.c.h.b16 %v888
    %v1047 = vunpack.c.l.b16 %v889
    %v1048 = vunpack.c.h.b16 %v889
    %v1049 = vunpack.c.l.b16 %v890
    %v1050 = vunpack.c.h.b16 %v890
    %v1051 = vunpack.c.l.b16 %v891
    %v1052 = vunpack.c.h.b16 %v891
    %v1053 = vunpack.c.l.b16 %v892
    %v1054 = vunpack.c.h.b16 %v892
    %v1055 = vunpack.c.l.b16 %v893
    %v1056 = vunpack.c.h.b16 %v893
    %v1057 = vunpack.c.l.b16 %v894
    %v1058 = vunpack.c.h.b16 %v894
    %v1059 = vunpack.c.l.b16 %v895
    %v1060 = vunpack.c.h.b16 %v895
    %v1061 = vunpack.c.l.b16 %v896
    %v1062 = vunpack.c.h.b16 %v896
    %v1063 = vunpack.c.l.b16 %v897
    %v1064 = vunpack.c.h.b16 %v897
    %v1065 = vunpack.c.l.b16 %v898
    %v1066 = vunpack.c.h.b16 %v898
    %v1067 = vunpack.c.l.b16 %v899
    %v1068 = vunpack.c.h.b16 %v899
    %v1069 = vunpack.c.l.b16 %v900
    %v1070 = vunpack.c.h.b16 %v900
    %v1071 = vunpack.c.l.b16 %v901
    %v1072 = vunpack.c.h.b16 %v901
    %v1073 = vunpack.c.l.b16 %v902
    %v1074 = vunpack.c.h.b16 %v902
    %v1075 = vunpack.c.l.b16 %v903
    %v1076 = vunpack.c.h.b16 %v903
    %v1077 = vunpack.c.l.b16 %v904
    %v1078 = vunpack.c.h.b16 %v904
    %v1079 = vunpack.c.l.b16 %v905
    %v1080 = vunpack.c.h.b16 %v905
    %v1081 = vunpack.c.l.b16 %v906
    %v1082 = vunpack.c.h.b16 %v906
    %v1083 = vunpack.c.l.b16 %v907
    %v1084 = vunpack.c.h.b16 %v907
    %v1085 = vunpack.c.l.b16 %v908
    %v1086 = vunpack.c.h.b16 %v908
    %v1087 = vunpack.c.l.b16 %v909
    %v1088 = vunpack.c.h.b16 %v909
    %v1089 = vunpack.c.l.b16 %v910
    %v1090 = vunpack.c.h.b16 %v910
    %v1091 = vunpack.c.l.b16 %v911
    %v1092 = vunpack.c.h.b16 %v911
    %v1093 = vunpack.c.l.b16 %v912
    %v1094 = vunpack.c.h.b16 %v912
    %v1095 = vunpack.c.l.b16 %v913
    %v1096 = vunpack.c.h.b16 %v913
    %v1097 = vunpack.c.l.b16 %v914
    %v1098 = vunpack.c.h.b16 %v914
    %v1099 = vunpack.c.l.b16 %v915
    %v1100 = vunpack.c.h.b16 %v915
    %v1101 = vunpack.c.l.b16 %v916
    %v1102 = vunpack.c.h.b16 %v916
    %v1103 = vunpack.c.l.b16 %v917
    %v1104 = vunpack.c.h.b16 %v917
    %v1105 = vunpack.c.l.b16 %v918
    %v1106 = vunpack.c.h.b16 %v918
    %v1107 = vunpack.c.l.b16 %v919
    %v1108 = vunpack.c.h.b16 %v919
    %v1109 = vunpack.c.l.b16 %v920
    %v1110 = vunpack.c.h.b16 %v920
    %v1111 = vunpack.c.l.b16 %v921
    %v1112 = vunpack.c.h.b16 %v921
    %v1113 = vunpack.c.l.b16 %v922
    %v1114 = vunpack.c.h.b16 %v922
    %v1115 = vunpack.c.l.b16 %v923
    %v1116 = vunpack.c.h.b16 %v923
    %v1117 = vunpack.c.l.b16 %v924
    %v1118 = vunpack.c.h.b16 %v924
    %v1119 = vunpack.c.l.b16 %v925
    %v1120 = vunpack.c.h.b16 %v925
    %v1121 = vunpack.c.l.b16 %v926
    %v1122 = vunpack.c.h.b16 %v926
    %v1123 = vunpack.c.l.b16 %v927
    %v1124 = vunpack.c.h.b16 %v927
    %v1125 = vunpack.c.l.b16 %v928
    %v1126 = vunpack.c.h.b16 %v928
    %v1127 = vunpack.c.l.b16 %v929
    %v1128 = vunpack.c.h.b16 %v929
    %v1129 = vunpack.c.l.b16 %v930
    %v1130 = vunpack.c.h.b16 %v930
    %v1131 = vunpack.c.l.b16 %v931
    %v1132 = vunpack.c.h.b16 %v931
    %v1133 = vunpack.c.l.b16 %v932
    %v1134 = vunpack.c.h.b16 %v932
    %v1135 = vunpack.c.l.b16 %v933
    %v1136 = vunpack.c.h.b16 %v933
    %v1137 = vunpack.c.l.b16 %v934
    %v1138 = vunpack.c.h.b16 %v934
    %v1139 = vunpack.c.l.b16 %v935
    %v1140 = vunpack.c.h.b16 %v935
    %v1141 = vunpack.c.l.b16 %v936
    %v1142 = vunpack.c.h.b16 %v936
    %v1143 = vunpack.c.l.b16 %v937
    %v1144 = vunpack.c.h.b16 %v937
    %v1145 = vunpack.c.l.b16 %v938
    %v1146 = vunpack.c.h.b16 %v938
    %v1147 = vunpack.c.l.b16 %v939
    %v1148 = vunpack.c.h.b16 %v939
    %v1149 = vunpack.c.l.b16 %v940
    %v1150 = vunpack.c.h.b16 %v940
    %v1151 = vpack.c.b16 %v1031, %v1023
    %v1152 = vpack.c.b16 %v1032, %v1024
    %v1153 = vpack.c.b16 %v1033, %v1025
    %v1154 = vpack.c.b16 %v1034, %v1026
    %v1155 = vpack.c.b16 %v1035, %v1027
    %v1156 = vpack.c.b16 %v1036, %v1028
    %v1157 = vpack.c.b16 %v1037, %v1029
    %v1158 = vpack.c.b16 %v1038, %v1030
    %v1159 = vpack.c.b16 %v1047, %v1039
    %v1160 = vpack.c.b16 %v1048, %v1040
    %v1161 = vpack.c.b16 %v1049, %v1041
    %v1162 = vpack.c.b16 %v1050, %v1042
    %v1163 = vpack.c.b16 %v1051, %v1043
    %v1164 = vpack.c.b16 %v1052, %v1044
    %v1165 = vpack.c.b16 %v1053, %v1045
    %v1166 = vpack.c.b16 %v1054, %v1046
    %v1167 = vpack.c.b16 %v1063, %v1055
    %v1168 = vpack.c.b16 %v1064, %v1056
    %v1169 = vpack.c.b16 %v1065, %v1057
    %v1170 = vpack.c.b16 %v1066, %v1058
    %v1171 = vpack.c.b16 %v1067, %v1059
    %v1172 = vpack.c.b16 %v1068, %v1060
    %v1173 = vpack.c.b16 %v1069, %v1061
    %v1174 = vpack.c.b16 %v1070, %v1062
    %v1175 = vpack.c.b16 %v1079, %v1071
    %v1176 = vpack.c.b16 %v1080, %v1072
    %v1177 = vpack.c.b16 %v1081, %v1073
    %v1178 = vpack.c.b16 %v1082, %v1074
    %v1179 = vpack.c.b16 %v1083, %v1075
    %v1180 = vpack.c.b16 %v1084, %v1076
    %v1181 = vpack.c.b16 %v1085, %v1077
    %v1182 = vpack.c.b16 %v1086, %v1078
    %v1183 = vpack.c.b16 %v1095, %v1087
    %v1184 = vpack.c.b16 %v1096, %v1088
    %v1185 = vpack.c.b16 %v1097, %v1089
    %v1186 = vpack.c.b16 %v1098, %v1090
    %v1187 = vpack.c.b16 %v1099, %v1091
    %v1188 = vpack.c.b16 %v1100, %v1092
    %v1189 = vpack.c.b16 %v1101, %v1093
    %v1190 = vpack.c.b16 %v1102, %v1094
    %v1191 = vpack.c.b16 %v1111, %v1103
    %v1192 = vpack.c.b16 %v1112, %v1104
    %v1193 = vpack.c.b16 %v1113, %v1105
    %v1194 = vpack.c.b16 %v1114, %v1106
    %v1195 = vpack.c.b16 %v1115, %v1107
    %v1196 = vpack.c.b16 %v1116, %v1108
    %v1197 = vpack.c.b16 %v1117, %v1109
    %v1198 = vpack.c.b16 %v1118, %v1110
    %v1199 = vpack.c.b16 %v1127, %v1119
    %v1200 = vpack.c.b16 %v1128, %v1120
    %v1201 = vpack.c.b16 %v1129, %v1121
    %v1202 = vpack.c.b16 %v1130, %v1122
    %v1203 = vpack.c.b16 %v1131, %v1123
    %v1204 = vpack.c.b16 %v1132, %v1124
    %v1205 = vpack.c.b16 %v1133, %v1125
    %v1206 = vpack.c.b16 %v1134, %v1126
    %v1207 = vpack.c.b16 %v1143, %v1135
    %v1208 = vpack.c.b16 %v1144, %v1136
    %v1209 = vpack.c.b16 %v1145, %v1137
    %v1210 = vpack.c.b16 %v1146, %v1138
    %v1211 = vpack.c.b16 %v1147, %v1139
    %v1212 = vpack.c.b16 %v1148, %v1140
    %v1213 = vpack.c.b16 %v1149, %v1141
    %v1214 = vpack.c.b16 %v1150, %v1142
    %1279 = vmatpush.bf16.msra.mxu0 %v1207
    %1280 = vmatpush.bf16.msra.mxu0 %v1199
    %1281 = vmatpush.bf16.msra.mxu0 %v1191
    %1282 = vmatpush.bf16.msra.mxu0 %v1183
    %1283 = vmatpush.bf16.msra.mxu0 %v1175
    %1284 = vmatpush.bf16.msra.mxu0 %v1167
    %1285 = vmatpush.bf16.msra.mxu0 %v1159
    %1286 = vmatpush.bf16.msra.mxu0 %v1151
    %1287 = vmatmul.bf16.gmra.mxu0 %v876
    %v1288 = vpop.f32.mrf.mxu0
    %v1289 = vadd.f32 %v943, %v1288
    %v1290 = vpop.f32.mrf.mxu0
    %1291 = vdwg.mxu0
    %1292 = vmatpush.bf16.msra.mxu0 %v1208
    %1293 = vmatpush.bf16.msra.mxu0 %v1200
    %1294 = vmatpush.bf16.msra.mxu0 %v1192
    %1295 = vmatpush.bf16.msra.mxu0 %v1184
    %1296 = vmatpush.bf16.msra.mxu0 %v1176
    %1297 = vmatpush.bf16.msra.mxu0 %v1168
    %1298 = vmatpush.bf16.msra.mxu0 %v1160
    %1299 = vmatpush.bf16.msra.mxu0 %v1152
    %1300 = vmatmul.bf16.gmra.mxu0 %v876
    %v1301 = vpop.f32.mrf.mxu0
    %v1302 = vadd.f32 %v944, %v1301
    %v1303 = vpop.f32.mrf.mxu0
    %1304 = vdwg.mxu0
    %1305 = vmatpush.bf16.msra.mxu0 %v1209
    %1306 = vmatpush.bf16.msra.mxu0 %v1201
    %1307 = vmatpush.bf16.msra.mxu0 %v1193
    %1308 = vmatpush.bf16.msra.mxu0 %v1185
    %1309 = vmatpush.bf16.msra.mxu0 %v1177
    %1310 = vmatpush.bf16.msra.mxu0 %v1169
    %1311 = vmatpush.bf16.msra.mxu0 %v1161
    %1312 = vmatpush.bf16.msra.mxu0 %v1153
    %1313 = vmatmul.bf16.gmra.mxu0 %v876
    %v1314 = vpop.f32.mrf.mxu0
    %v1315 = vadd.f32 %v945, %v1314
    %v1316 = vpop.f32.mrf.mxu0
    %1317 = vdwg.mxu0
    %1318 = vmatpush.bf16.msra.mxu0 %v1210
    %1319 = vmatpush.bf16.msra.mxu0 %v1202
    %1320 = vmatpush.bf16.msra.mxu0 %v1194
    %1321 = vmatpush.bf16.msra.mxu0 %v1186
    %1322 = vmatpush.bf16.msra.mxu0 %v1178
    %1323 = vmatpush.bf16.msra.mxu0 %v1170
    %1324 = vmatpush.bf16.msra.mxu0 %v1162
    %1325 = vmatpush.bf16.msra.mxu0 %v1154
    %1326 = vmatmul.bf16.gmra.mxu0 %v876
    %v1327 = vpop.f32.mrf.mxu0
    %v1328 = vadd.f32 %v946, %v1327
    %v1329 = vpop.f32.mrf.mxu0
    %1330 = vdwg.mxu0
    %1331 = vmatpush.bf16.msra.mxu0 %v1211
    %1332 = vmatpush.bf16.msra.mxu0 %v1203
    %1333 = vmatpush.bf16.msra.mxu0 %v1195
    %1334 = vmatpush.bf16.msra.mxu0 %v1187
    %1335 = vmatpush.bf16.msra.mxu0 %v1179
    %1336 = vmatpush.bf16.msra.mxu0 %v1171
    %1337 = vmatpush.bf16.msra.mxu0 %v1163
    %1338 = vmatpush.bf16.msra.mxu0 %v1155
    %1339 = vmatmul.bf16.gmra.mxu0 %v876
    %v1340 = vpop.f32.mrf.mxu0
    %v1341 = vadd.f32 %v947, %v1340
    %v1342 = vpop.f32.mrf.mxu0
    %1343 = vdwg.mxu0
    %1344 = vmatpush.bf16.msra.mxu0 %v1212
    %1345 = vmatpush.bf16.msra.mxu0 %v1204
    %1346 = vmatpush.bf16.msra.mxu0 %v1196
    %1347 = vmatpush.bf16.msra.mxu0 %v1188
    %1348 = vmatpush.bf16.msra.mxu0 %v1180
    %1349 = vmatpush.bf16.msra.mxu0 %v1172
    %1350 = vmatpush.bf16.msra.mxu0 %v1164
    %1351 = vmatpush.bf16.msra.mxu0 %v1156
    %1352 = vmatmul.bf16.gmra.mxu0 %v876
    %v1353 = vpop.f32.mrf.mxu0
    %v1354 = vadd.f32 %v948, %v1353
    %v1355 = vpop.f32.mrf.mxu0
    %1356 = vdwg.mxu0
    %1357 = vmatpush.bf16.msra.mxu0 %v1213
    %1358 = vmatpush.bf16.msra.mxu0 %v1205
    %1359 = vmatpush.bf16.msra.mxu0 %v1197
    %1360 = vmatpush.bf16.msra.mxu0 %v1189
    %1361 = vmatpush.bf16.msra.mxu0 %v1181
    %1362 = vmatpush.bf16.msra.mxu0 %v1173
    %1363 = vmatpush.bf16.msra.mxu0 %v1165
    %1364 = vmatpush.bf16.msra.mxu0 %v1157
    %1365 = vmatmul.bf16.gmra.mxu0 %v876
    %v1366 = vpop.f32.mrf.mxu0
    %v1367 = vadd.f32 %v949, %v1366
    %v1368 = vpop.f32.mrf.mxu0
    %1369 = vdwg.mxu0
    %1370 = vmatpush.bf16.msra.mxu0 %v1214
    %1371 = vmatpush.bf16.msra.mxu0 %v1206
    %1372 = vmatpush.bf16.msra.mxu0 %v1198
    %1373 = vmatpush.bf16.msra.mxu0 %v1190
    %1374 = vmatpush.bf16.msra.mxu0 %v1182
    %1375 = vmatpush.bf16.msra.mxu0 %v1174
    %1376 = vmatpush.bf16.msra.mxu0 %v1166
    %1377 = vmatpush.bf16.msra.mxu0 %v1158
    %1378 = vmatmul.bf16.gmra.mxu0 %v876
    %v1379 = vpop.f32.mrf.mxu0
    %v1380 = vadd.f32 %v950, %v1379
    %v1381 = vpop.f32.mrf.mxu0
    %1382 = vdwg.mxu0
    %v1383 = vsub.f32 0.0, %v1289
    %v1384 = vsub.f32 0.0, %v1302
    %v1385 = vsub.f32 0.0, %v1315
    %v1386 = vsub.f32 0.0, %v1328
    %v1387 = vsub.f32 0.0, %v1341
    %v1388 = vsub.f32 0.0, %v1354
    %v1389 = vsub.f32 0.0, %v1367
    %v1390 = vsub.f32 0.0, %v1380
    %v1391 = vmul.f32 %v1383, 1.442695
    %v1392 = vpow.pop %v1391
    %v1393 = vmul.f32 %v1384, 1.442695
    %v1394 = vpow.pop %v1393
    %v1395 = vmul.f32 %v1385, 1.442695
    %v1396 = vpow.pop %v1395
    %v1397 = vmul.f32 %v1386, 1.442695
    %v1398 = vpow.pop %v1397
    %v1399 = vmul.f32 %v1387, 1.442695
    %v1400 = vpow.pop %v1399
    %v1401 = vmul.f32 %v1388, 1.442695
    %v1402 = vpow.pop %v1401
    %v1403 = vmul.f32 %v1389, 1.442695
    %v1404 = vpow.pop %v1403
    %v1405 = vmul.f32 %v1390, 1.442695
    %v1406 = vpow.pop %v1405
    %v1407 = vadd.f32 %v1392, 1.0
    %v1408 = vadd.f32 %v1394, 1.0
    %v1409 = vadd.f32 %v1396, 1.0
    %v1410 = vadd.f32 %v1398, 1.0
    %v1411 = vadd.f32 %v1400, 1.0
    %v1412 = vadd.f32 %v1402, 1.0
    %v1413 = vadd.f32 %v1404, 1.0
    %v1414 = vadd.f32 %v1406, 1.0
    %v1415 = vrcp.pop %v1407
    %v1416 = vrcp.pop %v1408
    %v1417 = vrcp.pop %v1409
    %v1418 = vrcp.pop %v1410
    %v1419 = vrcp.pop %v1411
    %v1420 = vrcp.pop %v1412
    %v1421 = vrcp.pop %v1413
    %v1422 = vrcp.pop %v1414
    %v1423 = vpack.c.bf16 %v1416, %v1415
    %v1424 = vpack.c.bf16 %v1418, %v1417
    %v1425 = vpack.c.bf16 %v1420, %v1419
    %v1426 = vpack.c.bf16 %v1422, %v1421
    %v1431 = vrot.slane %v1423, 3
    %v1432 = vrot.slane %v1424, 6
    %v1433 = vrot.slane %v1424, 1
    %v1434 = vrot.slane %v1425, 4
    %v1435 = vrot.slane %v1425, 7
    %v1436 = vrot.slane %v1426, 2
    %v1437 = vrot.slane %v1426, 5
    %vm1438 = vcmask 1040384
    %v1441 = vsel %vm1438, %v1423, %v1431
    %vm1442 = vcmask 1042434
    %v1445 = vsel %vm1442, %v1432, %v1433
    %vm1446 = vcmask 1041408
    %v1447 = vsel %vm1446, %v1441, %v1445
    %vm1448 = vcmask 1044484
    %v1451 = vsel %vm1448, %v1434, %v1435
    %vm1452 = vcmask 1046534
    %v1455 = vsel %vm1452, %v1436, %v1437
    %vm1456 = vcmask 1045508
    %v1457 = vsel %vm1456, %v1451, %v1455
    %vm1458 = vcmask 1043456
    %v1459 = vsel %vm1458, %v1447, %v1457
    %1461 = vst [vmem:[#allocation11] sm:$0xff] %v1459
    // Predicated region
    $region50: #{tpu_custom_call.1} parent=1 // pred_check
      _
    $region51: #{tpu_custom_call.1} parent=1 // pred_check_branch
      %1463 = sbr.rel (0) target = $region53
    $region52: #{tpu_custom_call.1} parent=1 // pred_region
      %1465 = vsyncadd [#allocation4], 0
      %s1467 = sshll.u32 [#allocation11], 4
      %s1468 = int_to_ptr.vmem [resolvable:$true] %s1467
      %s1469 = sshll.u32 %s7, 4
      %s1470 = int_to_ptr.hbm [resolvable:$true] %s1469
      %1472 = dma.vmem_to_hbm [thread:$0]  %s1468, 128, %s1470, [#allocation4]
    $region53: #{tpu_custom_call.1} parent=1 // pred_fallthru
      _
    // Predicated region
    $region54: #{tpu_custom_call.1} parent=1 // pred_check
      _
    $region55: #{tpu_custom_call.1} parent=1 // pred_check_branch
      %1474 = sbr.rel (0) target = $region57
    $region56: #{tpu_custom_call.1} parent=1 // pred_region
      %1476 = vsyncadd [#allocation13], 0
      %s1478 = sshll.u32 [#allocation12], 4
      %s1479 = int_to_ptr.vmem [resolvable:$true] %s1478
      %s1480 = sshll.u32 %s8, 4
      %s1481 = int_to_ptr.hbm [resolvable:$true] %s1480
      %1483 = dma.vmem_to_hbm [thread:$0]  %s1479, 16, %s1481, [#allocation13]
    $region57: #{tpu_custom_call.1} parent=1 // pred_fallthru
      _
    // Predicated region
    $region58: #{tpu_custom_call.1} parent=1 // pred_check
      _
    $region59: #{tpu_custom_call.1} parent=1 // pred_check_branch
      %1485 = sbr.rel (0) target = $region61
    $region60: #{tpu_custom_call.1} parent=1 // pred_region
      %1487 = dma.done [#allocation4], 128
    $region61: #{tpu_custom_call.1} parent=1 // pred_fallthru
      _
    // Predicated region
    $region62: #{tpu_custom_call.1} parent=1 // pred_check
      _
    $region63: #{tpu_custom_call.1} parent=1 // pred_check_branch
      %1489 = sbr.rel (0) target = $region65
    $region64: #{tpu_custom_call.1} parent=1 // pred_region
      %1491 = dma.done [#allocation13], 16
    $region65: #{tpu_custom_call.1} parent=1 // pred_fallthru
      _
    %1492 = vsyncpa [#allocation3], 1
    %1493 = vsyncpa [#allocation6], 1
    %1494 = vsyncpa [#allocation9], 1
    %1495 = vsyncpa [#allocation4], 1
    %1496 = vsyncpa [#allocation13], 1

</llo_original>
